<compile_context>
chip_gen: v7x
topology: tpu7x:2x2x1
jax: 0.10.0
libtpu: 0.0.40
codegen_flags: <defaults>
</compile_context>

<pallas_src>
import math

import jax
import jax.numpy as jnp
from jax import lax
from jax.experimental import pallas as pl
from jax.experimental.pallas import tpu as pltpu


_LANE = 128
_VMEM_BUDGET = 26 * 1024 * 1024   # conservative double-buffered working set
_VMEM_LIMIT = 32 * 1024 * 1024    # scoped-VMEM window (safe on v5e/v6e/v7x)


def _fr_kernel_noacc(x_ref, xj_ref, w_ref, dwb_ref, o_ref):
    """Single reduction step (full K row in VMEM) -> no accumulator, no pl.when.

    x_ref  : (tm, Dp)  full feature row of x for this batch tile (resident over j)
    xj_ref : (tm, tn)  x columns aligned with the output j-tile (diag correction)
    w_ref  : (tn, Dp)  W rows for the output j-tile
    dwb_ref: (2, tn)   row 0 = diag(W)[j-tile], row 1 = b[j-tile]
    o_ref  : (tm, tn)
    """
    acc = lax.dot_general(
        x_ref[...],
        w_ref[...],
        dimension_numbers=(((1,), (1,)), ((), ())),
        preferred_element_type=jnp.float32,
    )
    acc = acc - xj_ref[...].astype(jnp.float32) * dwb_ref[0:1, :]
    o_ref[...] = (acc + dwb_ref[1:2, :]).astype(o_ref.dtype)


def _fr_kernel_acc(x_ref, xj_ref, w_ref, dwb_ref, o_ref, acc_ref):
    """Tiled-K fallback for very large D (reduction row does not fit VMEM).

    x_ref  : (tm, tk)   K-tile of x
    xj_ref : (tm, tn)   x columns aligned with the output j-tile
    w_ref  : (tn, tk)   K-tile of W rows
    dwb_ref: (2, tn)    row 0 = diag(W)[j-tile], row 1 = b[j-tile]
    o_ref  : (tm, tn)   written on last k only
    acc_ref: (tm, tn)   f32 VMEM accumulator
    """
    k = pl.program_id(2)

    @pl.when(k == 0)
    def _init():
        # Fold the diagonal correction into the accumulator init.
        acc_ref[...] = -(xj_ref[...].astype(jnp.float32) * dwb_ref[0:1, :])

    acc_ref[...] += lax.dot_general(
        x_ref[...],
        w_ref[...],
        dimension_numbers=(((1,), (1,)), ((), ())),
        preferred_element_type=jnp.float32,
    )

    @pl.when(k == pl.num_programs(2) - 1)
    def _fin():
        o_ref[...] = (acc_ref[...] + dwb_ref[1:2, :]).astype(o_ref.dtype)


def _pick_tile(dim, preferred):
    """Largest preferred tile that evenly divides `dim`, else the full dim."""
    for t in preferred:
        if t <= dim and dim % t == 0:
            return t
    return dim


def feature_regression(x, W, b, *, vmem_budget_bytes=_VMEM_BUDGET):
    """x: [B, D], W: [D, D], b: [D]  ->  [B, D]  (== F.linear(x, W*m, b))."""
    B, D = x.shape
    assert W.shape == (D, D) and b.shape == (D,)
    dtype = x.dtype
    isz = jnp.dtype(dtype).itemsize

    # Lane-densify the feature dim (avoids masked vst / sub-width vregs).
    Dp = max(_LANE, ((D + _LANE - 1) // _LANE) * _LANE)
    if Dp != D:
        x = jnp.pad(x, ((0, 0), (0, Dp - D)))
        W = jnp.pad(W, ((0, Dp - D), (0, Dp - D)))
        b = jnp.pad(b, (0, Dp - D))

    # diag(W) and b packed into a single (2, Dp) f32 side input.
    dwb = jnp.stack([jnp.diagonal(W), b]).astype(jnp.float32)

    tm = _pick_tile(B, (1024, 512, 256, 128, 64, 32, 16, 8))
    tn = _pick_tile(Dp, (512, 256, 128))   # Dp % 128 == 0, so always found

    def vmem_noacc(tm_, tn_):
        # double-buffered: x row + W slab + x_j + out (+ tiny dwb)
        return 2 * isz * (tm_ * Dp + tn_ * Dp + 2 * tm_ * tn_) + 2 * 4 * 2 * tn_

    # Shrink tiles until the double-buffered working set fits the budget.
    while vmem_noacc(tm, tn) > vmem_budget_bytes and tm > 8 and (tm // 2) % 8 == 0:
        tm //= 2
    while vmem_noacc(tm, tn) > vmem_budget_bytes and tn > _LANE:
        tn //= 2

    use_acc = vmem_noacc(tm, tn) > vmem_budget_bytes
    tk = Dp
    if use_acc:
        tk = _pick_tile(Dp, (2048, 1024, 512, 256, 128))

        def vmem_acc(tm_, tn_, tk_):
            return (2 * isz * (tm_ * tk_ + tn_ * tk_ + 2 * tm_ * tn_)
                    + 4 * tm_ * tn_ + 2 * 4 * 2 * tn_)

        while vmem_acc(tm, tn, tk) > vmem_budget_bytes and tk > _LANE:
            tk //= 2
        while vmem_acc(tm, tn, tk) > vmem_budget_bytes and (tm // 2) % 8 == 0:
            tm //= 2

    # v7x has 2 TensorCores: expose >= 2 parallel output tiles when possible.
    if (B // tm) * (Dp // tn) < 2:
        if tn >= 2 * _LANE:
            tn //= 2
        elif tm % 2 == 0 and (tm // 2) % 8 == 0:
            tm //= 2

    n_i, n_j = B // tm, Dp // tn

    if not use_acc:
        grid = (n_i, n_j)
        kernel = _fr_kernel_noacc
        in_specs = [
            pl.BlockSpec((tm, Dp), lambda i, j: (i, 0)),   # x (full K row, resident over j)
            pl.BlockSpec((tm, tn), lambda i, j: (i, j)),   # x_j  (diag correction)
            pl.BlockSpec((tn, Dp), lambda i, j: (j, 0)),   # W rows
            pl.BlockSpec((2, tn), lambda i, j: (0, j)),    # [diag(W); b]
        ]
        out_spec = pl.BlockSpec((tm, tn), lambda i, j: (i, j))
        scratch = []
        dims = ("parallel", "parallel")
        # x read once, x_j once, W read n_i times, out written once.
        bytes_accessed = isz * (2 * B * Dp + Dp * Dp * n_i + B * Dp) + 8 * Dp * n_i
    else:
        n_k = Dp // tk
        grid = (n_i, n_j, n_k)
        kernel = _fr_kernel_acc
        in_specs = [
            pl.BlockSpec((tm, tk), lambda i, j, k: (i, k)),   # x K-tile
            pl.BlockSpec((tm, tn), lambda i, j, k: (i, j)),   # x_j (constant over k)
            pl.BlockSpec((tn, tk), lambda i, j, k: (j, k)),   # W K-tile
            pl.BlockSpec((2, tn), lambda i, j, k: (0, j)),    # [diag(W); b]
        ]
        out_spec = pl.BlockSpec((tm, tn), lambda i, j, k: (i, j))
        scratch = [pltpu.VMEM((tm, tn), jnp.float32)]
        dims = ("parallel", "parallel", "arbitrary")
        # x re-read n_j times, x_j once, W read n_i times, out written once.
        bytes_accessed = (isz * (B * Dp * n_j + B * Dp + Dp * Dp * n_i + B * Dp)
                          + 8 * Dp * n_i)

    cost = pl.CostEstimate(
        flops=2 * B * Dp * Dp,
        transcendentals=0,
        bytes_accessed=int(bytes_accessed),
    )

    out_p = pl.pallas_call(
        kernel,
        out_shape=jax.ShapeDtypeStruct((B, Dp), dtype),
        grid_spec=pltpu.PrefetchScalarGridSpec(
            num_scalar_prefetch=0,
            grid=grid,
            in_specs=in_specs,
            out_specs=out_spec,
            scratch_shapes=scratch,
        ),
        compiler_params=pltpu.CompilerParams(
            dimension_semantics=dims,
            vmem_limit_bytes=_VMEM_LIMIT,
        ),
        cost_estimate=cost,
    )(x, x, W, dwb)

    return out_p if Dp == D else out_p[:, :D]


def _run_case(key, B, D, atol, rtol, **kwargs):
    k_x, k_w, k_b = jax.random.split(key, 3)
    # Mirror reset_parameters(): W (2-D) ~ U(-stdv, stdv), stdv = 1/sqrt(D);
    # b (1-D) is skipped there, so init it deterministically here too.
    stdv = 1.0 / math.sqrt(D)
    W = jax.random.uniform(k_w, (D, D), jnp.float32, minval=-stdv, maxval=stdv)
    b = jax.random.uniform(k_b, (D,), jnp.float32, minval=-stdv, maxval=stdv)
    x = jax.random.normal(k_x, (B, D), jnp.float32)

    out = jax.block_until_ready(feature_regression(x, W, b, **kwargs))

    m = jnp.ones((D, D), jnp.float32) - jnp.eye(D, dtype=jnp.float32)
    ref = x @ (W * m).T + b
    assert out.shape == (B, D)
    err = float(jnp.max(jnp.abs(out - ref)))
    assert jnp.allclose(out, ref, atol=atol, rtol=rtol), (
        f"mismatch B={B} D={D} max_abs_err={err}"
    )


if __name__ == "__main__":
    key = jax.random.PRNGKey(0)
    # Module-sized toy shape (D < 128 -> padded to lane-dense 128, then sliced).
    _run_case(jax.random.fold_in(key, 0), B=8, D=32, atol=1e-5, rtol=1e-5)
    # Larger shape exercising the collapsed-K tiled (M, N) grid.
    _run_case(jax.random.fold_in(key, 1), B=16, D=512, atol=5e-4, rtol=1e-4)
    # Force the tiled-K accumulator fallback path with a tiny VMEM budget.
    _run_case(jax.random.fold_in(key, 2), B=16, D=512, atol=5e-4, rtol=1e-4,
              vmem_budget_bytes=256 * 1024)
    print("KERNEL_OK")
</pallas_src>

<mosaic_0001>
module attributes {stable_mosaic.version = 11 : i64} {
  func.func @_fr_kernel_noacc(%arg0: i32, %arg1: i32, %arg2: memref<8x128xf32, #tpu.memory_space<vmem>>, %arg3: memref<8x128xf32, #tpu.memory_space<vmem>>, %arg4: memref<128x128xf32, #tpu.memory_space<vmem>>, %arg5: memref<2x128xf32, #tpu.memory_space<vmem>>, %arg6: memref<8x128xf32, #tpu.memory_space<vmem>>) attributes {dimension_semantics = [#tpu.dimension_semantics<parallel>, #tpu.dimension_semantics<parallel>], iteration_bounds = array<i64: 1, 1>, scalar_prefetch = 0 : i64, scratch_operands = 0 : i64, tpu.core_type = #tpu.core_type<tc>, window_params = [{transform_indices = @transform_0, window_bounds = array<i64: 8, 128>}, {transform_indices = @transform_1, window_bounds = array<i64: 8, 128>}, {transform_indices = @transform_2, window_bounds = array<i64: 128, 128>}, {transform_indices = @transform_3, window_bounds = array<i64: 2, 128>}, {transform_indices = @transform_4, window_bounds = array<i64: 8, 128>}]} {
    %c0 = arith.constant 0 : index
    %c0_0 = arith.constant 0 : index
    %0 = vector.load %arg2[%c0, %c0_0] : memref<8x128xf32, #tpu.memory_space<vmem>>, vector<8x128xf32>
    %c0_1 = arith.constant 0 : index
    %c0_2 = arith.constant 0 : index
    %1 = vector.load %arg4[%c0_1, %c0_2] : memref<128x128xf32, #tpu.memory_space<vmem>>, vector<128x128xf32>
    %cst = arith.constant dense<0.000000e+00> : vector<8x128xf32>
    %2 = tpu.matmul %0, %1, %cst {dimension_numbers = #tpu.dot_dimension_numbers<[1], [1], [0], [0], [0, 0, 1, 0], [], []>} : vector<8x128xf32>, vector<128x128xf32>, vector<8x128xf32> -> vector<8x128xf32>
    %c0_3 = arith.constant 0 : index
    %c0_4 = arith.constant 0 : index
    %3 = vector.load %arg3[%c0_3, %c0_4] : memref<8x128xf32, #tpu.memory_space<vmem>>, vector<8x128xf32>
    %c0_5 = arith.constant 0 : index
    %c0_6 = arith.constant 0 : index
    %4 = vector.load %arg5[%c0_5, %c0_6] : memref<2x128xf32, #tpu.memory_space<vmem>>, vector<1x128xf32>
    %5 = vector.broadcast %4 : vector<1x128xf32> to vector<8x128xf32>
    %6 = arith.mulf %3, %5 : vector<8x128xf32>
    %7 = arith.subf %2, %6 : vector<8x128xf32>
    %c1 = arith.constant 1 : index
    %c0_7 = arith.constant 0 : index
    %8 = vector.load %arg5[%c1, %c0_7] : memref<2x128xf32, #tpu.memory_space<vmem>>, vector<1x128xf32>
    %9 = vector.broadcast %8 : vector<1x128xf32> to vector<8x128xf32>
    %10 = arith.addf %7, %9 : vector<8x128xf32>
    %c0_8 = arith.constant 0 : index
    %c0_9 = arith.constant 0 : index
    %11 = vector.load %arg6[%c0_8, %c0_9] : memref<8x128xf32, #tpu.memory_space<vmem>>, vector<8x128xf32>
    tpu.vector_store %arg6[%c0_8, %c0_9], %10 {strides = array<i32>} : memref<8x128xf32, #tpu.memory_space<vmem>>, vector<8x128xf32>,
    return
  }
  func.func @transform_0(%arg0: i32, %arg1: i32) -> (i32, i32) {
    %c0_i32 = arith.constant 0 : i32
    %c0_i32_0 = arith.constant 0 : i32
    return %arg0, %c0_i32 : i32, i32
  }
  func.func @transform_1(%arg0: i32, %arg1: i32) -> (i32, i32) {
    %c0_i32 = arith.constant 0 : i32
    return %arg0, %arg1 : i32, i32
  }
  func.func @transform_2(%arg0: i32, %arg1: i32) -> (i32, i32) {
    %c0_i32 = arith.constant 0 : i32
    %c0_i32_0 = arith.constant 0 : i32
    return %arg1, %c0_i32 : i32, i32
  }
  func.func @transform_3(%arg0: i32, %arg1: i32) -> (i32, i32) {
    %c0_i32 = arith.constant 0 : i32
    %c0_i32_0 = arith.constant 0 : i32
    return %c0_i32, %arg1 : i32, i32
  }
  func.func @transform_4(%arg0: i32, %arg1: i32) -> (i32, i32) {
    %c0_i32 = arith.constant 0 : i32
    return %arg0, %arg1 : i32, i32
  }
}

</mosaic_0001>

<llo_original>
// kernel: tpu_custom_call.1
$region0: #{tpu_custom_call.1}
  #allocation0 [shape = 'u32[]', space=smem, size = 0x4, offset = 0x4, fixed_abs, tag = 'smem constant byte address 0x4 - core index']
  #allocation1 [shape = 'u32[144,128]{1,0:T(1,128)}', space=vmem, size = 0x12000, scoped, tag = 'internal scratch']
  %s0 = inlined_call_operand.hbm [shape: f32[8,128], index: 0, kind: input, shape index: {}]
  %s1 = inlined_call_operand.hbm [shape: f32[8,128], index: 1, kind: input, shape index: {}]
  %s2 = inlined_call_operand.hbm [shape: f32[128,128], index: 2, kind: input, shape index: {}]
  %s3 = inlined_call_operand.vmem [shape: f32[2,128], index: 3, kind: input, shape index: {}]
  %s4 = inlined_call_operand.hbm [shape: f32[8,128], index: 4, kind: output, shape index: {}]
  %s5 = sld [smem:[#allocation0]]
  $region38: #{tpu_custom_call.1} parent=0
    _
  %s7 = ssub.s32 1, %s5
  %s8 = scalar_select 0, %s7, %s5
  $region1: #{tpu_custom_call.1} parent=0
    #allocation2 [shape = 'u8[4096]{0}', space=vmem, size = 0x1000, scoped, tag = 'input window, operand 0, single buffered']
    #allocation3 [shape = 's32[1]{0}', space=sflag, size = 0x4, scoped, tag = 'scoped memory for tpu_custom_call.1']
    #allocation4 [shape = 's32[1]{0}', space=sflag, size = 0x4, scoped, tag = 'scoped memory for tpu_custom_call.1']
    #allocation5 [shape = 'u8[4096]{0}', space=vmem, size = 0x1000, scoped, tag = 'input window, operand 1, single buffered']
    #allocation6 [shape = 's32[1]{0}', space=sflag, size = 0x4, scoped, tag = 'scoped memory for tpu_custom_call.1']
    #allocation7 [shape = 'u8[65536]{0}', space=vmem, size = 0x10000, scoped, tag = 'input window, operand 2, single buffered']
    #allocation8 [shape = 'u8[4096]{0}', space=vmem, size = 0x1000, scoped, tag = 'output window, operand 0, single buffered']
    %9 = vsyncpa [#allocation3], 0
    %10 = vsyncpa [#allocation6], 0
    %11 = vsyncpa [#allocation4], 0
    // Predicated region
    $region2: #{tpu_custom_call.1} parent=1 // pred_check
      _
    $region3: #{tpu_custom_call.1} parent=1 // pred_check_branch
      %13 = sbr.rel (0) target = $region5
    $region4: #{tpu_custom_call.1} parent=1 // pred_region
      %s15 = ssub.s32 128, 128
      %16 = vsyncadd [#allocation3], %s15
      %s18 = sshll.u32 [#allocation2], 4
      %s19 = int_to_ptr.vmem [resolvable:$true] %s18
      %21 = dma.hbm_to_vmem [thread:$0]  %s0, 128, %s19, [#allocation3]
    $region5: #{tpu_custom_call.1} parent=1 // pred_fallthru
      _
    // Predicated region
    $region6: #{tpu_custom_call.1} parent=1 // pred_check
      _
    $region7: #{tpu_custom_call.1} parent=1 // pred_check_branch
      %23 = sbr.rel (0) target = $region9
    $region8: #{tpu_custom_call.1} parent=1 // pred_region
      %s25 = ssub.s32 128, 128
      %26 = vsyncadd [#allocation6], %s25
      %s28 = sshll.u32 [#allocation5], 4
      %s29 = int_to_ptr.vmem [resolvable:$true] %s28
      %31 = dma.hbm_to_vmem [thread:$0]  %s1, 128, %s29, [#allocation6]
    $region9: #{tpu_custom_call.1} parent=1 // pred_fallthru
      _
    // Predicated region
    $region10: #{tpu_custom_call.1} parent=1 // pred_check
      _
    $region11: #{tpu_custom_call.1} parent=1 // pred_check_branch
      %33 = sbr.rel (0) target = $region13
    $region12: #{tpu_custom_call.1} parent=1 // pred_region
      %s35 = ssub.s32 2048, 2048
      %36 = vsyncadd [#allocation6], %s35
      %s37 = sshll.u32 [#allocation7], 4
      %s38 = int_to_ptr.vmem [resolvable:$true] %s37
      %43 = dma.hbm_to_vmem [thread:$0]  %s2, 2048, %s38, [#allocation6], 128, 128, 8
    $region13: #{tpu_custom_call.1} parent=1 // pred_fallthru
      _
    // Predicated region
    $region14: #{tpu_custom_call.1} parent=1 // pred_check
      _
    $region15: #{tpu_custom_call.1} parent=1 // pred_check_branch
      %45 = sbr.rel (0) target = $region17
    $region16: #{tpu_custom_call.1} parent=1 // pred_region
      _
    $region17: #{tpu_custom_call.1} parent=1 // pred_fallthru
      _
    // Predicated region
    $region18: #{tpu_custom_call.1} parent=1 // pred_check
      _
    $region19: #{tpu_custom_call.1} parent=1 // pred_check_branch
      %47 = sbr.rel (0) target = $region21
    $region20: #{tpu_custom_call.1} parent=1 // pred_region
      %48 = dma.done [#allocation3], 128
    $region21: #{tpu_custom_call.1} parent=1 // pred_fallthru
      _
    // Predicated region
    $region22: #{tpu_custom_call.1} parent=1 // pred_check
      _
    $region23: #{tpu_custom_call.1} parent=1 // pred_check_branch
      %50 = sbr.rel (0) target = $region25
    $region24: #{tpu_custom_call.1} parent=1 // pred_region
      %51 = dma.done [#allocation6], 128
    $region25: #{tpu_custom_call.1} parent=1 // pred_fallthru
      _
    // Predicated region
    $region26: #{tpu_custom_call.1} parent=1 // pred_check
      _
    $region27: #{tpu_custom_call.1} parent=1 // pred_check_branch
      %53 = sbr.rel (0) target = $region29
    $region28: #{tpu_custom_call.1} parent=1 // pred_region
      %54 = dma.done [#allocation6], 2048
    $region29: #{tpu_custom_call.1} parent=1 // pred_fallthru
      _
    %v55 = vld [vmem:[#allocation2] sm:$0xff]
    %v56 = vld [vmem:[#allocation7] sm:$0xff]
    %v57 = vld [vmem:[#allocation7 + $0x8] sm:$0xff]
    %v58 = vld [vmem:[#allocation7 + $0x10] sm:$0xff]
    %v59 = vld [vmem:[#allocation7 + $0x18] sm:$0xff]
    %v60 = vld [vmem:[#allocation7 + $0x20] sm:$0xff]
    %v61 = vld [vmem:[#allocation7 + $0x28] sm:$0xff]
    %v62 = vld [vmem:[#allocation7 + $0x30] sm:$0xff]
    %v63 = vld [vmem:[#allocation7 + $0x38] sm:$0xff]
    %v64 = vld [vmem:[#allocation7 + $0x40] sm:$0xff]
    %v65 = vld [vmem:[#allocation7 + $0x48] sm:$0xff]
    %v66 = vld [vmem:[#allocation7 + $0x50] sm:$0xff]
    %v67 = vld [vmem:[#allocation7 + $0x58] sm:$0xff]
    %v68 = vld [vmem:[#allocation7 + $0x60] sm:$0xff]
    %v69 = vld [vmem:[#allocation7 + $0x68] sm:$0xff]
    %v70 = vld [vmem:[#allocation7 + $0x70] sm:$0xff]
    %v71 = vld [vmem:[#allocation7 + $0x78] sm:$0xff]
    %72 = vmatprep.subr.mxu0 0.0
    %73 = vmatpush1.xpose.msra.mxu0 %v56
    %74 = vmatprep.subr.mxu0 0.0
    %75 = vmatpush1.xpose.msra.mxu0 %v57
    %76 = vmatprep.subr.mxu0 0.0
    %77 = vmatpush1.xpose.msra.mxu0 %v58
    %78 = vmatprep.subr.mxu0 0.0
    %79 = vmatpush1.xpose.msra.mxu0 %v59
    %80 = vmatprep.subr.mxu0 0.0
    %81 = vmatpush1.xpose.msra.mxu0 %v60
    %82 = vmatprep.subr.mxu0 0.0
    %83 = vmatpush1.xpose.msra.mxu0 %v61
    %84 = vmatprep.subr.mxu0 0.0
    %85 = vmatpush1.xpose.msra.mxu0 %v62
    %86 = vmatprep.subr.mxu0 0.0
    %87 = vmatpush1.xpose.msra.mxu0 %v63
    %88 = vmatprep.subr.mxu0 0.0
    %89 = vmatpush1.xpose.msra.mxu0 %v64
    %90 = vmatprep.subr.mxu0 0.0
    %91 = vmatpush1.xpose.msra.mxu0 %v65
    %92 = vmatprep.subr.mxu0 0.0
    %93 = vmatpush1.xpose.msra.mxu0 %v66
    %94 = vmatprep.subr.mxu0 0.0
    %95 = vmatpush1.xpose.msra.mxu0 %v67
    %96 = vmatprep.subr.mxu0 0.0
    %97 = vmatpush1.xpose.msra.mxu0 %v68
    %98 = vmatprep.subr.mxu0 0.0
    %99 = vmatpush1.xpose.msra.mxu0 %v69
    %100 = vmatprep.subr.mxu0 0.0
    %101 = vmatpush1.xpose.msra.mxu0 %v70
    %102 = vmatprep.subr.mxu0 0.0
    %103 = vmatpush1.xpose.msra.mxu0 %v71
    %104 = vmatprep.subr.mxu0 0.0
    %105 = vmatpush1.xpose.msra.mxu0 0.0
    %106 = vmatprep.subr.mxu0 0.0
    %107 = vmatpush1.xpose.msra.mxu0 0.0
    %108 = vmatprep.subr.mxu0 0.0
    %109 = vmatpush1.xpose.msra.mxu0 0.0
    %110 = vmatprep.subr.mxu0 0.0
    %111 = vmatpush1.xpose.msra.mxu0 0.0
    %112 = vmatprep.subr.mxu0 0.0
    %113 = vmatpush1.xpose.msra.mxu0 0.0
    %114 = vmatprep.subr.mxu0 0.0
    %115 = vmatpush1.xpose.msra.mxu0 0.0
    %116 = vmatprep.subr.mxu0 0.0
    %117 = vmatpush1.xpose.msra.mxu0 0.0
    %118 = vmatprep.subr.mxu0 0.0
    %119 = vmatpush1.xpose.msra.mxu0 0.0
    %120 = vmatprep.subr.mxu0 0.0
    %121 = vmatpush1.xpose.msra.mxu0 0.0
    %122 = vmatprep.subr.mxu0 0.0
    %123 = vmatpush1.xpose.msra.mxu0 0.0
    %124 = vmatprep.subr.mxu0 0.0
    %125 = vmatpush1.xpose.msra.mxu0 0.0
    %126 = vmatprep.subr.mxu0 0.0
    %127 = vmatpush1.xpose.msra.mxu0 0.0
    %128 = vmatprep.subr.mxu0 0.0
    %129 = vmatpush1.xpose.msra.mxu0 0.0
    %130 = vmatprep.subr.mxu0 0.0
    %131 = vmatpush1.xpose.msra.mxu0 0.0
    %132 = vmatprep.subr.mxu0 0.0
    %133 = vmatpush1.xpose.msra.mxu0 0.0
    %134 = vmatprep.subr.mxu0 0.0
    %135 = vmatpush1.xpose.msra.mxu0 0.0
    %136 = vmatprep.mubr.f32.mxu0 0.0
    %137 = vmatmul.mubr.f32.gmra.mrb[0].mxu0 %v55
    %v138 = vpop.f32.mrb[0].mxu0
    %v139 = vadd.f32 0.0, %v138
    %v140 = vpop.f32.mrb[0].mxu0
    %141 = vdwg.mxu0
    %v142 = vld [vmem:[#allocation5] sm:$0xff]
    %v143 = vld [vmem:[%s3] sm:$0x1]
    %v144 = vlaneseq
    %v145 = vshrl.u32 %v144, 7
    %v146 = vsub.s32 0, %v145
    %v147 = vrot.slane %v143, %v146
    %v148 = vmul.f32 %v142, %v147
    %v149 = vsub.f32 %v139, %v148
    %v150 = vld [vmem:[%s3 + $0x1] sm:$0x1]
    %v151 = vlaneseq
    %v152 = vshrl.u32 %v151, 7
    %v153 = vsub.s32 0, %v152
    %v154 = vrot.slane %v150, %v153
    %v155 = vadd.f32 %v149, %v154
    %156 = vst [vmem:[#allocation8] sm:$0xff] %v155
    // Predicated region
    $region30: #{tpu_custom_call.1} parent=1 // pred_check
      _
    $region31: #{tpu_custom_call.1} parent=1 // pred_check_branch
      %158 = sbr.rel (0) target = $region33
    $region32: #{tpu_custom_call.1} parent=1 // pred_region
      %s160 = ssub.s32 128, 128
      %161 = vsyncadd [#allocation4], %s160
      %s163 = sshll.u32 [#allocation8], 4
      %s164 = int_to_ptr.vmem [resolvable:$true] %s163
      %166 = dma.vmem_to_hbm [thread:$0]  %s164, 128, %s4, [#allocation4]
    $region33: #{tpu_custom_call.1} parent=1 // pred_fallthru
      _
    // Predicated region
    $region34: #{tpu_custom_call.1} parent=1 // pred_check
      _
    $region35: #{tpu_custom_call.1} parent=1 // pred_check_branch
      %168 = sbr.rel (0) target = $region37
    $region36: #{tpu_custom_call.1} parent=1 // pred_region
      %169 = dma.done [#allocation4], 128
    $region37: #{tpu_custom_call.1} parent=1 // pred_fallthru
      _
    %170 = vsyncpa [#allocation3], 1
    %171 = vsyncpa [#allocation6], 1
    %172 = vsyncpa [#allocation4], 1

</llo_original>
